<compile_context>
chip_gen: v6e
topology: v6e:2x2x1
jax: 0.10.0
libtpu: 0.0.40
codegen_flags: <defaults>
</compile_context>

<pallas_src>
import functools

import jax
import jax.numpy as jnp
from jax.experimental import pallas as pl
from jax.experimental.pallas import tpu as pltpu


def _kd_loss_kernel(t_ref, s_ref, out_ref, *, inv_temp, tb, total_b, mask_last):
    i = pl.program_id(0)

    # Load the (TB, C) tiles and do all math in f32. Fold 1/temp as a multiply.
    t = t_ref[...].astype(jnp.float32) * inv_temp
    s = s_ref[...].astype(jnp.float32) * inv_temp

    # Student log-softmax pieces (log_q itself is never materialized).
    s_max = jnp.max(s, axis=-1, keepdims=True)
    s_shift = s - s_max
    s_lse = jnp.log(jnp.sum(jnp.exp(s_shift), axis=-1, keepdims=True))   # (TB,1)

    # Teacher softmax pieces (p itself is never materialized).
    t_max = jnp.max(t, axis=-1, keepdims=True)
    t_shift = t - t_max
    t_exp = jnp.exp(t_shift)
    t_sum = jnp.sum(t_exp, axis=-1, keepdims=True)                       # (TB,1)

    # Row-wise KL:
    #   sum_c p*(log p - log q)
    # = (1/t_sum) * sum_c t_exp*(t_shift - s_shift) + s_lse - log(t_sum)
    num = jnp.sum(t_exp * (t_shift - s_shift), axis=-1, keepdims=True)   # (TB,1)
    row = num * pl.reciprocal(t_sum) + s_lse - jnp.log(t_sum)            # (TB,1)

    # Lane-dense (1, 8, 128) output slab: partial sum in [0,0,0], zeros
    # elsewhere, so the wrapper can do a dense full-slab reduction.
    sub = jax.lax.broadcasted_iota(jnp.int32, (8, 128), 0)
    lane = jax.lax.broadcasted_iota(jnp.int32, (8, 128), 1)
    pos0 = (sub == 0) & (lane == 0)

    def _write(partial):
        out_ref[...] = jnp.where(pos0, partial, 0.0).astype(jnp.float32)[None]

    if mask_last:
        last = pl.num_programs(0) - 1

        @pl.when(i == last)
        def _():
            # Mask rows beyond the true batch (garbage rows of the ragged tile).
            row_idx = i * tb + jax.lax.broadcasted_iota(jnp.int32, row.shape, 0)
            _write(jnp.sum(jnp.where(row_idx < total_b, row, 0.0)))

        @pl.when(i != last)
        def _():
            _write(jnp.sum(row))
    else:
        _write(jnp.sum(row))


def _vmem_capacity_bytes():
    try:
        cap = getattr(pltpu.get_tpu_info(), "vmem_capacity_bytes", None)
        if cap:
            return int(cap)
    except Exception:
        pass
    return 128 * 1024 * 1024


def _vmem_limit_bytes():
    cap = _vmem_capacity_bytes()
    if cap <= 64 * 1024 * 1024:        # v7x-class parts: leave headroom in 64 MiB
        return 40 * 1024 * 1024
    return 64 * 1024 * 1024            # 128 MiB parts (v5e/v6e)


def _choose_block_rows(C, itemsize, vmem_limit):
    # Use ~75% of the requested VMEM limit for the row-proportional working set.
    budget = (vmem_limit * 3) // 4
    # Per-row VMEM bytes:
    #   2 inputs x 2 pipeline buffers at the input dtype
    # + ~4 live f32 (TB, C) temporaries inside the kernel body
    per_row = 4 * C * itemsize + 4 * C * 4
    tb = budget // max(1, per_row)
    align = 16 if itemsize < 4 else 8
    return max(align, (tb // align) * align)


def kd_loss(teacher_logits, student_logits, temp: float, reduction: str,
            block_rows: int | None = None):
    """Pallas implementation of KDLoss_source_code.forward.

    teacher_logits, student_logits: (B, C) arrays. Returns a scalar float32.
    """
    assert teacher_logits.shape == student_logits.shape
    B, C = teacher_logits.shape
    itemsize = jnp.dtype(teacher_logits.dtype).itemsize
    align = 16 if itemsize < 4 else 8
    vmem_limit = _vmem_limit_bytes()

    if block_rows is None:
        tb = _choose_block_rows(C, itemsize, vmem_limit)
    else:
        tb = max(align, (block_rows // align) * align)

    if tb >= B:
        if B >= 2 * align:
            # Split small batches into >= 2 blocks so the "parallel" grid axis
            # has work for both TensorCores on v7x (one extra ~0.35us step on
            # single-TC parts — negligible).
            tb = align * pl.cdiv(pl.cdiv(B, 2), align)
        else:
            tb = B                      # single full-dim block (always legal)
    num_blocks = pl.cdiv(B, tb)
    mask_last = (B % tb) != 0

    kernel = functools.partial(
        _kd_loss_kernel, inv_temp=1.0 / float(temp), tb=tb, total_b=B,
        mask_last=mask_last)

    partial_slab = pl.pallas_call(
        kernel,
        out_shape=jax.ShapeDtypeStruct((num_blocks, 8, 128), jnp.float32),
        grid=(num_blocks,),
        in_specs=[
            pl.BlockSpec((tb, C), lambda i: (i, 0)),
            pl.BlockSpec((tb, C), lambda i: (i, 0)),
        ],
        out_specs=pl.BlockSpec((1, 8, 128), lambda i: (i, 0, 0)),
        compiler_params=pltpu.CompilerParams(
            dimension_semantics=("parallel",),
            vmem_limit_bytes=vmem_limit,
        ),
    )(teacher_logits, student_logits)

    # Dense full-slab reduction (only [i, 0, 0] entries are non-zero).
    total = jnp.sum(partial_slab)
    if reduction == "sum":
        result = total
    else:
        # matches kl.sum(1).mean() — divide by the GLOBAL batch size.
        result = total / jnp.float32(B)
    return result * jnp.float32(float(temp) * float(temp))


def _reference(teacher_logits, student_logits, temp, reduction):
    # Pure-JAX reference mirroring the PyTorch module.
    t = teacher_logits.astype(jnp.float32) / temp
    s = student_logits.astype(jnp.float32) / temp
    log_q = jax.nn.log_softmax(s, axis=-1)
    p = jax.nn.softmax(t, axis=-1)
    log_p = jax.nn.log_softmax(t, axis=-1)
    kl = jnp.where(p > 0.0, p * (log_p - log_q), 0.0)
    kl = jnp.sum(kl) if reduction == "sum" else jnp.mean(jnp.sum(kl, axis=1))
    return kl * (temp ** 2)


if __name__ == "__main__":
    key = jax.random.PRNGKey(0)
    k1, k2, k3, k4, k5, k6 = jax.random.split(key, 6)
    temp = 4.0

    # 1) Small, tile-friendly case (single block path, no masking).
    B, C = 8, 128
    teacher = jax.random.normal(k1, (B, C), dtype=jnp.float32) * 3.0
    student = jax.random.normal(k2, (B, C), dtype=jnp.float32) * 3.0
    for reduction in ("batchmean", "sum"):
        out = jax.block_until_ready(kd_loss(teacher, student, temp, reduction))
        ref = _reference(teacher, student, temp, reduction)
        assert jnp.allclose(out, ref, rtol=1e-5, atol=1e-5), (reduction, out, ref)

    # 2) Multi-block path with a ragged last tile (forced small blocks AND the
    #    default auto-sized path, both exercise last-block-only masking).
    B2, C2 = 50, 256
    teacher2 = jax.random.normal(k3, (B2, C2), dtype=jnp.float32) * 3.0
    student2 = jax.random.normal(k4, (B2, C2), dtype=jnp.float32) * 3.0
    for reduction in ("batchmean", "sum"):
        out = jax.block_until_ready(
            kd_loss(teacher2, student2, temp, reduction, block_rows=16))
        ref = _reference(teacher2, student2, temp, reduction)
        assert jnp.allclose(out, ref, rtol=1e-5, atol=1e-5), (reduction, out, ref)
        out2 = jax.block_until_ready(kd_loss(teacher2, student2, temp, reduction))
        assert jnp.allclose(out2, ref, rtol=1e-5, atol=1e-5), (reduction, out2, ref)

    # 3) bf16 inputs (halved HBM traffic); math still f32 inside the kernel.
    B3, C3 = 16, 128
    teacher3 = (jax.random.normal(k5, (B3, C3), dtype=jnp.float32) * 3.0).astype(jnp.bfloat16)
    student3 = (jax.random.normal(k6, (B3, C3), dtype=jnp.float32) * 3.0).astype(jnp.bfloat16)
    out = jax.block_until_ready(kd_loss(teacher3, student3, temp, "batchmean"))
    ref = _reference(teacher3, student3, temp, "batchmean")
    assert jnp.allclose(out, ref, rtol=1e-4, atol=1e-4), (out, ref)

    print("KERNEL_OK")
</pallas_src>

<mosaic_0001>
module attributes {stable_mosaic.version = 11 : i64} {
  func.func @_kd_loss_kernel(%arg0: i32, %arg1: memref<8x128xf32, #tpu.memory_space<vmem>>, %arg2: memref<8x128xf32, #tpu.memory_space<vmem>>, %arg3: memref<1x8x128xf32, #tpu.memory_space<vmem>>) attributes {dimension_semantics = [#tpu.dimension_semantics<parallel>], iteration_bounds = array<i64: 1>, scalar_prefetch = 0 : i64, scratch_operands = 0 : i64, tpu.core_type = #tpu.core_type<tc>, window_params = [{transform_indices = @transform_0, window_bounds = array<i64: 8, 128>}, {transform_indices = @transform_1, window_bounds = array<i64: 8, 128>}, {transform_indices = @transform_2, window_bounds = array<i64: 1, 8, 128>}]} {
    %c0 = arith.constant 0 : index
    %c0_0 = arith.constant 0 : index
    %0 = vector.load %arg1[%c0, %c0_0] : memref<8x128xf32, #tpu.memory_space<vmem>>, vector<8x128xf32>
    %cst = arith.constant 2.500000e-01 : f32
    %1 = vector.broadcast %cst : f32 to vector<8x128xf32>
    %2 = arith.mulf %0, %1 : vector<8x128xf32>
    %c0_1 = arith.constant 0 : index
    %c0_2 = arith.constant 0 : index
    %3 = vector.load %arg2[%c0_1, %c0_2] : memref<8x128xf32, #tpu.memory_space<vmem>>, vector<8x128xf32>
    %cst_3 = arith.constant 2.500000e-01 : f32
    %4 = vector.broadcast %cst_3 : f32 to vector<8x128xf32>
    %5 = arith.mulf %3, %4 : vector<8x128xf32>
    %cst_4 = arith.constant dense<0xFF800000> : vector<8xf32>
    %6 = vector.multi_reduction <maximumf>, %5, %cst_4 [1] : vector<8x128xf32> to vector<8xf32>
    %7 = vector.shape_cast %6 : vector<8xf32> to vector<8x1xf32>
    %8 = vector.broadcast %7 : vector<8x1xf32> to vector<8x128xf32>
    %9 = arith.subf %5, %8 : vector<8x128xf32>
    %10 = math.exp %9 : vector<8x128xf32>
    %cst_5 = arith.constant dense<0.000000e+00> : vector<8xf32>
    %11 = vector.multi_reduction <add>, %10, %cst_5 [1] : vector<8x128xf32> to vector<8xf32>
    %12 = vector.shape_cast %11 : vector<8xf32> to vector<8x1xf32>
    %13 = math.log %12 : vector<8x1xf32>
    %cst_6 = arith.constant dense<0xFF800000> : vector<8xf32>
    %14 = vector.multi_reduction <maximumf>, %2, %cst_6 [1] : vector<8x128xf32> to vector<8xf32>
    %15 = vector.shape_cast %14 : vector<8xf32> to vector<8x1xf32>
    %16 = vector.broadcast %15 : vector<8x1xf32> to vector<8x128xf32>
    %17 = arith.subf %2, %16 : vector<8x128xf32>
    %18 = math.exp %17 : vector<8x128xf32>
    %cst_7 = arith.constant dense<0.000000e+00> : vector<8xf32>
    %19 = vector.multi_reduction <add>, %18, %cst_7 [1] : vector<8x128xf32> to vector<8xf32>
    %20 = vector.shape_cast %19 : vector<8xf32> to vector<8x1xf32>
    %21 = arith.subf %17, %9 : vector<8x128xf32>
    %22 = arith.mulf %18, %21 : vector<8x128xf32>
    %cst_8 = arith.constant dense<0.000000e+00> : vector<8xf32>
    %23 = vector.multi_reduction <add>, %22, %cst_8 [1] : vector<8x128xf32> to vector<8xf32>
    %24 = vector.shape_cast %23 : vector<8xf32> to vector<8x1xf32>
    %25 = tpu.reciprocal %20 : vector<8x1xf32> -> vector<8x1xf32>
    %26 = arith.mulf %24, %25 : vector<8x1xf32>
    %27 = arith.addf %26, %13 : vector<8x1xf32>
    %28 = math.log %20 : vector<8x1xf32>
    %29 = arith.subf %27, %28 : vector<8x1xf32>
    %30 = tpu.iota {dimensions = array<i32: 0>} : vector<8x128xi32>
    %31 = tpu.iota {dimensions = array<i32: 1>} : vector<8x128xi32>
    %c0_i32 = arith.constant 0 : i32
    %32 = vector.broadcast %c0_i32 : i32 to vector<8x128xi32>
    %33 = arith.cmpi eq, %30, %32 : vector<8x128xi32>
    %c0_i32_9 = arith.constant 0 : i32
    %34 = vector.broadcast %c0_i32_9 : i32 to vector<8x128xi32>
    %35 = arith.cmpi eq, %31, %34 : vector<8x128xi32>
    %36 = arith.andi %33, %35 : vector<8x128xi1>
    %37 = vector.shape_cast %29 : vector<8x1xf32> to vector<1x8x1xf32>
    %cst_10 = arith.constant dense<0.000000e+00> : vector<1xf32>
    %38 = vector.multi_reduction <add>, %37, %cst_10 [1, 2] : vector<1x8x1xf32> to vector<1xf32>
    %39 = vector.shape_cast %38 : vector<1xf32> to vector<1x1x1xf32>
    %40 = vector.extract %39[0, 0, 0] : f32 from vector<1x1x1xf32>
    %cst_11 = arith.constant 0.000000e+00 : f32
    %41 = vector.broadcast %40 : f32 to vector<8x128xf32>
    %42 = vector.broadcast %cst_11 : f32 to vector<8x128xf32>
    %43 = arith.select %36, %41, %42 : vector<8x128xi1>, vector<8x128xf32>
    %44 = vector.shape_cast %43 : vector<8x128xf32> to vector<1x8x128xf32>
    %c0_12 = arith.constant 0 : index
    %c0_13 = arith.constant 0 : index
    %c0_14 = arith.constant 0 : index
    %45 = vector.load %arg3[%c0_12, %c0_13, %c0_14] : memref<1x8x128xf32, #tpu.memory_space<vmem>>, vector<1x8x128xf32>
    tpu.vector_store %arg3[%c0_12, %c0_13, %c0_14], %44 {strides = array<i32>} : memref<1x8x128xf32, #tpu.memory_space<vmem>>, vector<1x8x128xf32>,
    return
  }
  func.func @transform_0(%arg0: i32) -> (i32, i32) {
    %c0_i32 = arith.constant 0 : i32
    %c0_i32_0 = arith.constant 0 : i32
    return %arg0, %c0_i32 : i32, i32
  }
  func.func @transform_1(%arg0: i32) -> (i32, i32) {
    %c0_i32 = arith.constant 0 : i32
    %c0_i32_0 = arith.constant 0 : i32
    return %arg0, %c0_i32 : i32, i32
  }
  func.func @transform_2(%arg0: i32) -> (i32, i32, i32) {
    %c0_i32 = arith.constant 0 : i32
    %c0_i32_0 = arith.constant 0 : i32
    %c0_i32_1 = arith.constant 0 : i32
    return %arg0, %c0_i32, %c0_i32_0 : i32, i32, i32
  }
}

</mosaic_0001>

<llo_original>
// kernel: tpu_custom_call.1
$region0: #{tpu_custom_call.1}
  #allocation0 [shape = 'u32[]', space=smem, size = 0x4, offset = 0x4, fixed_abs, tag = 'smem constant byte address 0x4 - core index']
  #allocation1 [shape = 'u32[144,128]{1,0:T(1,128)}', space=vmem, size = 0x12000, scoped, tag = 'internal scratch']
  %s0 = inlined_call_operand.hbm [shape: f32[8,128], index: 0, kind: input, shape index: {}]
  %s1 = inlined_call_operand.hbm [shape: f32[8,128], index: 1, kind: input, shape index: {}]
  %s2 = inlined_call_operand.hbm [shape: f32[1,8,128], index: 2, kind: output, shape index: {}]
  %s3 = sld [smem:[#allocation0]]
  $region26: #{tpu_custom_call.1} parent=0
    _
  %s5 = ssub.s32 1, %s3
  %s6 = scalar_select 0, %s5, %s3
  $region1: #{tpu_custom_call.1} parent=0
    #allocation2 [shape = 'u8[4096]{0}', space=vmem, size = 0x1000, scoped, tag = 'input window, operand 0, single buffered']
    #allocation3 [shape = 's32[1]{0}', space=sflag, size = 0x4, scoped, tag = 'scoped memory for tpu_custom_call.1']
    #allocation4 [shape = 's32[1]{0}', space=sflag, size = 0x4, scoped, tag = 'scoped memory for tpu_custom_call.1']
    #allocation5 [shape = 'u8[4096]{0}', space=vmem, size = 0x1000, scoped, tag = 'input window, operand 1, single buffered']
    #allocation6 [shape = 's32[1]{0}', space=sflag, size = 0x4, scoped, tag = 'scoped memory for tpu_custom_call.1']
    #allocation7 [shape = 'u8[4096]{0}', space=vmem, size = 0x1000, scoped, tag = 'output window, operand 0, single buffered']
    %7 = vsyncpa [#allocation3], 0
    %8 = vsyncpa [#allocation6], 0
    %9 = vsyncpa [#allocation4], 0
    // Predicated region
    $region2: #{tpu_custom_call.1} parent=1 // pred_check
      _
    $region3: #{tpu_custom_call.1} parent=1 // pred_check_branch
      %11 = sbr.rel (0) target = $region5
    $region4: #{tpu_custom_call.1} parent=1 // pred_region
      %s13 = ssub.s32 128, 128
      %14 = vsyncadd [#allocation3], %s13
      %s16 = sshll.u32 [#allocation2], 4
      %s17 = int_to_ptr.vmem [resolvable:$true] %s16
      %19 = dma.hbm_to_vmem [thread:$0]  %s0, 128, %s17, [#allocation3]
    $region5: #{tpu_custom_call.1} parent=1 // pred_fallthru
      _
    // Predicated region
    $region6: #{tpu_custom_call.1} parent=1 // pred_check
      _
    $region7: #{tpu_custom_call.1} parent=1 // pred_check_branch
      %21 = sbr.rel (0) target = $region9
    $region8: #{tpu_custom_call.1} parent=1 // pred_region
      %s23 = ssub.s32 128, 128
      %24 = vsyncadd [#allocation6], %s23
      %s26 = sshll.u32 [#allocation5], 4
      %s27 = int_to_ptr.vmem [resolvable:$true] %s26
      %29 = dma.hbm_to_vmem [thread:$0]  %s1, 128, %s27, [#allocation6]
    $region9: #{tpu_custom_call.1} parent=1 // pred_fallthru
      _
    // Predicated region
    $region10: #{tpu_custom_call.1} parent=1 // pred_check
      _
    $region11: #{tpu_custom_call.1} parent=1 // pred_check_branch
      %31 = sbr.rel (0) target = $region13
    $region12: #{tpu_custom_call.1} parent=1 // pred_region
      %32 = dma.done [#allocation3], 128
    $region13: #{tpu_custom_call.1} parent=1 // pred_fallthru
      _
    // Predicated region
    $region14: #{tpu_custom_call.1} parent=1 // pred_check
      _
    $region15: #{tpu_custom_call.1} parent=1 // pred_check_branch
      %34 = sbr.rel (0) target = $region17
    $region16: #{tpu_custom_call.1} parent=1 // pred_region
      %35 = dma.done [#allocation6], 128
    $region17: #{tpu_custom_call.1} parent=1 // pred_fallthru
      _
    %v36 = vld [vmem:[#allocation2] sm:$0xff]
    %v37 = vmul.f32 %v36, 0.25
    %v38 = vld [vmem:[#allocation5] sm:$0xff]
    %v39 = vmul.f32 %v38, 0.25
    %40 = vmax.xlane.f32.xlu0 %v39
    %v41 = vpop.xlane.xlu0 %40
    %v42 = vsub.f32 %v39, %v41
    %v43 = vmul.f32 %v42, 1.442695
    %v44 = vpow.pop %v43
    %45 = vadd.xlane.f32.xlu0 %v44
    %v46 = vpop.xlane.xlu0 %45
    %v47 = vlog2.pop %v46
    %v48 = vmul.f32 %v47, 0.6931472
    %49 = vmax.xlane.f32.xlu0 %v37
    %v50 = vpop.xlane.xlu0 %49
    %v51 = vsub.f32 %v37, %v50
    %v52 = vmul.f32 %v51, 1.442695
    %v53 = vpow.pop %v52
    %54 = vadd.xlane.f32.xlu0 %v53
    %v55 = vpop.xlane.xlu0 %54
    %v56 = vsub.f32 %v51, %v42
    %v57 = vmul.f32 %v53, %v56
    %58 = vadd.xlane.f32.xlu0 %v57
    %v59 = vpop.xlane.xlu0 %58
    %v60 = vrcp.pop %v55
    %v61 = vmul.f32 %v59, %v60
    %v62 = vadd.f32 %v61, %v48
    %v63 = vlog2.pop %v55
    %v64 = vmul.f32 %v63, 0.6931472
    %v65 = vsub.f32 %v62, %v64
    %v66 = vlaneseq
    %v67 = vshrl.u32 %v66, 7
    %v68 = vlaneseq
    %v69 = vand.u32 %v68, 127
    %vm70 = vcmp.eq.s32.totalorder %v67, 0
    %vm71 = vcmp.eq.s32.totalorder %v69, 0
    %vm72 = vmand %vm70, %vm71
    %vm73 = vcmask 7168
    %v74 = vsel %vm73, %v65, 0.0
    %75 = vadd.xlane.f32.xlu0 %v74
    %v76 = vpop.xlane.xlu0 %75
    %v77 = vrot.slane %v76, 4
    %v78 = vadd.f32 %v76, %v77
    %v79 = vrot.slane %v78, 2
    %v80 = vadd.f32 %v78, %v79
    %v81 = vrot.slane %v80, 1
    %v82 = vadd.f32 %v80, %v81
    %s83 = vtos %v82
    %v84 = vstv %s83
    %v85 = vsel %vm72, %v84, 0.0
    %86 = vst [vmem:[#allocation7] sm:$0xff] %v85
    // Predicated region
    $region18: #{tpu_custom_call.1} parent=1 // pred_check
      _
    $region19: #{tpu_custom_call.1} parent=1 // pred_check_branch
      %88 = sbr.rel (0) target = $region21
    $region20: #{tpu_custom_call.1} parent=1 // pred_region
      %s90 = ssub.s32 128, 128
      %91 = vsyncadd [#allocation4], %s90
      %s93 = sshll.u32 [#allocation7], 4
      %s94 = int_to_ptr.vmem [resolvable:$true] %s93
      %96 = dma.vmem_to_hbm [thread:$0]  %s94, 128, %s2, [#allocation4]
    $region21: #{tpu_custom_call.1} parent=1 // pred_fallthru
      _
    // Predicated region
    $region22: #{tpu_custom_call.1} parent=1 // pred_check
      _
    $region23: #{tpu_custom_call.1} parent=1 // pred_check_branch
      %98 = sbr.rel (0) target = $region25
    $region24: #{tpu_custom_call.1} parent=1 // pred_region
      %99 = dma.done [#allocation4], 128
    $region25: #{tpu_custom_call.1} parent=1 // pred_fallthru
      _
    %100 = vsyncpa [#allocation3], 1
    %101 = vsyncpa [#allocation6], 1
    %102 = vsyncpa [#allocation4], 1

</llo_original>
